<compile_context>
chip_gen: v7x
topology: tpu7x:2x2x1
jax: 0.10.0
libtpu: 0.0.40
codegen_flags: <defaults>
</compile_context>

<pallas_src>
import functools

import jax
import jax.numpy as jnp
from jax.experimental import pallas as pl
from jax.experimental.pallas import tpu as pltpu


def _conv_bn_kernel(x_ref, w_ref, scale_ref, bias_ref, o_ref, col_ref):
    """One (batch, row-block) tile of conv3x3(s1,p1,no-bias) + inference BN.

    x_ref:     (1, TH+2, W+2, C)   halo'd NHWC input tile
    w_ref:     (9*C, Epad)         im2col conv weights, E padded to 128 lanes
    scale_ref: (1, Epad)           folded BatchNorm scale (gamma / sqrt(var+eps))
    bias_ref:  (1, Epad)           folded BatchNorm bias  (beta - mean*scale)
    o_ref:     (1, TH*W, Epad)     lane-dense output tile
    col_ref:   (TH, W, 9*C)        VMEM scratch holding the im2col patch
    """
    TH, W, KC = col_ref.shape
    C = KC // 9
    xt = x_ref[0]                                   # (TH+2, W+2, C)

    # Build the im2col patch ONCE: 9 shifted (TH, W, C) slabs concatenated
    # along the channel axis.  One copy per tap, no K=C micro-matmuls.
    for kh in range(3):
        for kw in range(3):
            k = kh * 3 + kw
            col_ref[:, :, k * C:(k + 1) * C] = xt[kh:kh + TH, kw:kw + W, :]

    cols = col_ref[...].reshape(TH * W, KC)
    y = jnp.dot(cols, w_ref[...], preferred_element_type=jnp.float32)
    # Inference BatchNorm folded to a per-output-channel affine (no ReLU:
    # the module's forward() does not apply it).
    y = y * scale_ref[...] + bias_ref[...]
    o_ref[0] = y.astype(o_ref.dtype)


def basic_conv2d_bn(x_nchw, weight_oihw, gamma, beta, running_mean,
                    running_var, *, eps=1e-5, tile_h=8):
    """Conv2d(3x3, stride=1, pad=1, bias=False) + BatchNorm2d (eval), NCHW."""
    N, C, H, W = x_nchw.shape
    E = weight_oihw.shape[0]
    Epad = ((E + 127) // 128) * 128
    if H % tile_h != 0:
        tile_h = H
    nH = H // tile_h

    # ---- layout plumbing (fused by XLA under jit) ----
    x = jnp.transpose(x_nchw, (0, 2, 3, 1))                      # NHWC
    x = jnp.pad(x, ((0, 0), (1, 1), (1, 1), (0, 0)))             # halo pad
    # Halo'd row tiles: (N, nH, TH+2, W+2, C) -> (N*nH, TH+2, W+2, C).
    row_idx = jnp.arange(nH)[:, None] * tile_h + jnp.arange(tile_h + 2)[None, :]
    tiles = x[:, row_idx].reshape(N * nH, tile_h + 2, W + 2, C)

    # im2col weights: OIHW -> (kh, kw, c, e) -> (9C, E), pad E to Epad lanes.
    w = jnp.transpose(weight_oihw, (2, 3, 1, 0)).reshape(9 * C, E)
    w = jnp.pad(w, ((0, 0), (0, Epad - E)))

    # Fold BatchNorm (inference) into per-channel scale / bias.
    scale = gamma * jax.lax.rsqrt(running_var + eps)
    bias = beta - running_mean * scale
    scale = jnp.pad(scale, (0, Epad - E)).reshape(1, Epad).astype(jnp.float32)
    bias = jnp.pad(bias, (0, Epad - E)).reshape(1, Epad).astype(jnp.float32)

    out = pl.pallas_call(
        _conv_bn_kernel,
        out_shape=jax.ShapeDtypeStruct((N * nH, tile_h * W, Epad), x_nchw.dtype),
        grid_spec=pltpu.PrefetchScalarGridSpec(
            num_scalar_prefetch=0,
            grid=(N * nH,),
            in_specs=[
                pl.BlockSpec((1, tile_h + 2, W + 2, C), lambda g: (g, 0, 0, 0)),
                pl.BlockSpec((9 * C, Epad), lambda g: (0, 0)),
                pl.BlockSpec((1, Epad), lambda g: (0, 0)),
                pl.BlockSpec((1, Epad), lambda g: (0, 0)),
            ],
            out_specs=pl.BlockSpec((1, tile_h * W, Epad), lambda g: (g, 0, 0)),
            scratch_shapes=[pltpu.VMEM((tile_h, W, 9 * C), jnp.float32)],
        ),
        compiler_params=pltpu.CompilerParams(
            dimension_semantics=("parallel",)),
    )(tiles, w, scale, bias)

    # Drop channel padding, restore (N, H, W, E), then back to NCHW to match
    # the PyTorch module's layout contract.
    out = out.reshape(N, H, W, Epad)[..., :E]
    # TODO(synk): downstream consumers should take NHWC directly to skip this transpose.
    return jnp.transpose(out, (0, 3, 1, 2))


if __name__ == "__main__":
    N, C, H, W = 2, 4, 16, 16
    E = 32
    eps = 1e-5

    key = jax.random.PRNGKey(0)
    kx, kw, kg, kb, km, kv = jax.random.split(key, 6)
    x = jax.random.normal(kx, (N, C, H, W), dtype=jnp.float32)
    weight = 0.1 * jax.random.normal(kw, (E, C, 3, 3), dtype=jnp.float32)   # OIHW, bias=False
    gamma = 1.0 + 0.1 * jax.random.normal(kg, (E,), dtype=jnp.float32)
    beta = 0.1 * jax.random.normal(kb, (E,), dtype=jnp.float32)
    running_mean = 0.1 * jax.random.normal(km, (E,), dtype=jnp.float32)
    running_var = 1.0 + 0.1 * jnp.abs(jax.random.normal(kv, (E,), dtype=jnp.float32))

    fwd = jax.jit(functools.partial(basic_conv2d_bn, eps=eps, tile_h=8))
    out = jax.block_until_ready(
        fwd(x, weight, gamma, beta, running_mean, running_var))

    # Reference: XLA conv (same semantics as nn.Conv2d 3x3/s1/p1, bias=False)
    # followed by inference-mode BatchNorm2d (no ReLU, matching forward()).
    conv_ref = jax.lax.conv_general_dilated(
        x, weight, window_strides=(1, 1), padding=((1, 1), (1, 1)),
        dimension_numbers=("NCHW", "OIHW", "NCHW"))
    s = gamma / jnp.sqrt(running_var + eps)
    ref = (conv_ref * s[None, :, None, None]
           + (beta - running_mean * s)[None, :, None, None])

    assert out.shape == (N, E, H, W)
    assert jnp.allclose(out, ref, atol=1e-4, rtol=1e-4)
    print("KERNEL_OK")
</pallas_src>

<mosaic_0001>
module attributes {stable_mosaic.version = 11 : i64} {
  func.func @_conv_bn_kernel(%arg0: i32, %arg1: memref<1x10x18x4xf32, #tpu.memory_space<vmem>>, %arg2: memref<36x128xf32, #tpu.memory_space<vmem>>, %arg3: memref<1x128xf32, #tpu.memory_space<vmem>>, %arg4: memref<1x128xf32, #tpu.memory_space<vmem>>, %arg5: memref<1x128x128xf32, #tpu.memory_space<vmem>>, %arg6: memref<8x16x36xf32, #tpu.memory_space<vmem>>) attributes {dimension_semantics = [#tpu.dimension_semantics<parallel>], iteration_bounds = array<i64: 4>, scalar_prefetch = 0 : i64, scratch_operands = 1 : i64, tpu.core_type = #tpu.core_type<tc>, window_params = [{transform_indices = @transform_0, window_bounds = array<i64: 1, 10, 18, 4>}, {pipeline_mode = #tpu.pipeline_mode<synchronous>, transform_indices = @transform_1, window_bounds = array<i64: 36, 128>}, {pipeline_mode = #tpu.pipeline_mode<synchronous>, transform_indices = @transform_2, window_bounds = array<i64: 1, 128>}, {pipeline_mode = #tpu.pipeline_mode<synchronous>, transform_indices = @transform_3, window_bounds = array<i64: 1, 128>}, {transform_indices = @transform_4, window_bounds = array<i64: 1, 128, 128>}]} {
    %c0 = arith.constant 0 : index
    %c0_0 = arith.constant 0 : index
    %c0_1 = arith.constant 0 : index
    %c0_2 = arith.constant 0 : index
    %0 = vector.load %arg1[%c0, %c0_0, %c0_1, %c0_2] : memref<1x10x18x4xf32, #tpu.memory_space<vmem>>, vector<1x10x18x4xf32>
    %1 = vector.shape_cast %0 : vector<1x10x18x4xf32> to vector<10x18x4xf32>
    %2 = vector.extract_strided_slice %1 {offsets = [0, 0, 0], sizes = [8, 16, 4], strides = [1, 1, 1]} : vector<10x18x4xf32> to vector<8x16x4xf32>
    %c0_3 = arith.constant 0 : index
    %c0_4 = arith.constant 0 : index
    %c0_5 = arith.constant 0 : index
    %3 = vector.load %arg6[%c0_3, %c0_4, %c0_5] : memref<8x16x36xf32, #tpu.memory_space<vmem>>, vector<8x16x4xf32>
    tpu.vector_store %arg6[%c0_3, %c0_4, %c0_5], %2 {strides = array<i32>} : memref<8x16x36xf32, #tpu.memory_space<vmem>>, vector<8x16x4xf32>,
    %4 = vector.extract_strided_slice %1 {offsets = [0, 1, 0], sizes = [8, 16, 4], strides = [1, 1, 1]} : vector<10x18x4xf32> to vector<8x16x4xf32>
    %c0_6 = arith.constant 0 : index
    %c0_7 = arith.constant 0 : index
    %c4 = arith.constant 4 : index
    %5 = vector.load %arg6[%c0_6, %c0_7, %c4] : memref<8x16x36xf32, #tpu.memory_space<vmem>>, vector<8x16x4xf32>
    tpu.vector_store %arg6[%c0_6, %c0_7, %c4], %4 {strides = array<i32>} : memref<8x16x36xf32, #tpu.memory_space<vmem>>, vector<8x16x4xf32>,
    %6 = vector.extract_strided_slice %1 {offsets = [0, 2, 0], sizes = [8, 16, 4], strides = [1, 1, 1]} : vector<10x18x4xf32> to vector<8x16x4xf32>
    %c0_8 = arith.constant 0 : index
    %c0_9 = arith.constant 0 : index
    %c8 = arith.constant 8 : index
    %7 = vector.load %arg6[%c0_8, %c0_9, %c8] : memref<8x16x36xf32, #tpu.memory_space<vmem>>, vector<8x16x4xf32>
    tpu.vector_store %arg6[%c0_8, %c0_9, %c8], %6 {strides = array<i32>} : memref<8x16x36xf32, #tpu.memory_space<vmem>>, vector<8x16x4xf32>,
    %8 = vector.extract_strided_slice %1 {offsets = [1, 0, 0], sizes = [8, 16, 4], strides = [1, 1, 1]} : vector<10x18x4xf32> to vector<8x16x4xf32>
    %c0_10 = arith.constant 0 : index
    %c0_11 = arith.constant 0 : index
    %c12 = arith.constant 12 : index
    %9 = vector.load %arg6[%c0_10, %c0_11, %c12] : memref<8x16x36xf32, #tpu.memory_space<vmem>>, vector<8x16x4xf32>
    tpu.vector_store %arg6[%c0_10, %c0_11, %c12], %8 {strides = array<i32>} : memref<8x16x36xf32, #tpu.memory_space<vmem>>, vector<8x16x4xf32>,
    %10 = vector.extract_strided_slice %1 {offsets = [1, 1, 0], sizes = [8, 16, 4], strides = [1, 1, 1]} : vector<10x18x4xf32> to vector<8x16x4xf32>
    %c0_12 = arith.constant 0 : index
    %c0_13 = arith.constant 0 : index
    %c16 = arith.constant 16 : index
    %11 = vector.load %arg6[%c0_12, %c0_13, %c16] : memref<8x16x36xf32, #tpu.memory_space<vmem>>, vector<8x16x4xf32>
    tpu.vector_store %arg6[%c0_12, %c0_13, %c16], %10 {strides = array<i32>} : memref<8x16x36xf32, #tpu.memory_space<vmem>>, vector<8x16x4xf32>,
    %12 = vector.extract_strided_slice %1 {offsets = [1, 2, 0], sizes = [8, 16, 4], strides = [1, 1, 1]} : vector<10x18x4xf32> to vector<8x16x4xf32>
    %c0_14 = arith.constant 0 : index
    %c0_15 = arith.constant 0 : index
    %c20 = arith.constant 20 : index
    %13 = vector.load %arg6[%c0_14, %c0_15, %c20] : memref<8x16x36xf32, #tpu.memory_space<vmem>>, vector<8x16x4xf32>
    tpu.vector_store %arg6[%c0_14, %c0_15, %c20], %12 {strides = array<i32>} : memref<8x16x36xf32, #tpu.memory_space<vmem>>, vector<8x16x4xf32>,
    %14 = vector.extract_strided_slice %1 {offsets = [2, 0, 0], sizes = [8, 16, 4], strides = [1, 1, 1]} : vector<10x18x4xf32> to vector<8x16x4xf32>
    %c0_16 = arith.constant 0 : index
    %c0_17 = arith.constant 0 : index
    %c24 = arith.constant 24 : index
    %15 = vector.load %arg6[%c0_16, %c0_17, %c24] : memref<8x16x36xf32, #tpu.memory_space<vmem>>, vector<8x16x4xf32>
    tpu.vector_store %arg6[%c0_16, %c0_17, %c24], %14 {strides = array<i32>} : memref<8x16x36xf32, #tpu.memory_space<vmem>>, vector<8x16x4xf32>,
    %16 = vector.extract_strided_slice %1 {offsets = [2, 1, 0], sizes = [8, 16, 4], strides = [1, 1, 1]} : vector<10x18x4xf32> to vector<8x16x4xf32>
    %c0_18 = arith.constant 0 : index
    %c0_19 = arith.constant 0 : index
    %c28 = arith.constant 28 : index
    %17 = vector.load %arg6[%c0_18, %c0_19, %c28] : memref<8x16x36xf32, #tpu.memory_space<vmem>>, vector<8x16x4xf32>
    tpu.vector_store %arg6[%c0_18, %c0_19, %c28], %16 {strides = array<i32>} : memref<8x16x36xf32, #tpu.memory_space<vmem>>, vector<8x16x4xf32>,
    %18 = vector.extract_strided_slice %1 {offsets = [2, 2, 0], sizes = [8, 16, 4], strides = [1, 1, 1]} : vector<10x18x4xf32> to vector<8x16x4xf32>
    %c0_20 = arith.constant 0 : index
    %c0_21 = arith.constant 0 : index
    %c32 = arith.constant 32 : index
    %19 = vector.load %arg6[%c0_20, %c0_21, %c32] : memref<8x16x36xf32, #tpu.memory_space<vmem>>, vector<8x16x4xf32>
    tpu.vector_store %arg6[%c0_20, %c0_21, %c32], %18 {strides = array<i32>} : memref<8x16x36xf32, #tpu.memory_space<vmem>>, vector<8x16x4xf32>,
    %c0_22 = arith.constant 0 : index
    %c0_23 = arith.constant 0 : index
    %c0_24 = arith.constant 0 : index
    %20 = vector.load %arg6[%c0_22, %c0_23, %c0_24] : memref<8x16x36xf32, #tpu.memory_space<vmem>>, vector<8x16x36xf32>
    %21 = vector.shape_cast %20 : vector<8x16x36xf32> to vector<128x36xf32>
    %c0_25 = arith.constant 0 : index
    %c0_26 = arith.constant 0 : index
    %22 = vector.load %arg2[%c0_25, %c0_26] : memref<36x128xf32, #tpu.memory_space<vmem>>, vector<36x128xf32>
    %cst = arith.constant dense<0.000000e+00> : vector<128x128xf32>
    %23 = tpu.matmul %21, %22, %cst {dimension_numbers = #tpu.dot_dimension_numbers<[1], [0], [0], [1], [0, 0, 1, 1], [], []>} : vector<128x36xf32>, vector<36x128xf32>, vector<128x128xf32> -> vector<128x128xf32>
    %c0_27 = arith.constant 0 : index
    %c0_28 = arith.constant 0 : index
    %24 = vector.load %arg3[%c0_27, %c0_28] : memref<1x128xf32, #tpu.memory_space<vmem>>, vector<1x128xf32>
    %25 = vector.broadcast %24 : vector<1x128xf32> to vector<128x128xf32>
    %26 = arith.mulf %23, %25 : vector<128x128xf32>
    %c0_29 = arith.constant 0 : index
    %c0_30 = arith.constant 0 : index
    %27 = vector.load %arg4[%c0_29, %c0_30] : memref<1x128xf32, #tpu.memory_space<vmem>>, vector<1x128xf32>
    %28 = vector.broadcast %27 : vector<1x128xf32> to vector<128x128xf32>
    %29 = arith.addf %26, %28 : vector<128x128xf32>
    %c0_31 = arith.constant 0 : index
    %c0_32 = arith.constant 0 : index
    %c0_33 = arith.constant 0 : index
    %30 = vector.load %arg5[%c0_31, %c0_32, %c0_33] : memref<1x128x128xf32, #tpu.memory_space<vmem>>, vector<1x128x128xf32>
    %31 = vector.shape_cast %30 : vector<1x128x128xf32> to vector<128x128xf32>
    %32 = vector.shape_cast %29 : vector<128x128xf32> to vector<1x128x128xf32>
    tpu.vector_store %arg5[%c0_31, %c0_32, %c0_33], %32 {strides = array<i32>} : memref<1x128x128xf32, #tpu.memory_space<vmem>>, vector<1x128x128xf32>,
    return
  }
  func.func @transform_0(%arg0: i32) -> (i32, i32, i32, i32) {
    %c0_i32 = arith.constant 0 : i32
    %c0_i32_0 = arith.constant 0 : i32
    %c0_i32_1 = arith.constant 0 : i32
    %c0_i32_2 = arith.constant 0 : i32
    return %arg0, %c0_i32, %c0_i32_0, %c0_i32_1 : i32, i32, i32, i32
  }
  func.func @transform_1(%arg0: i32) -> (i32, i32) {
    %c0_i32 = arith.constant 0 : i32
    %c0_i32_0 = arith.constant 0 : i32
    %c0_i32_1 = arith.constant 0 : i32
    return %c0_i32, %c0_i32_0 : i32, i32
  }
  func.func @transform_2(%arg0: i32) -> (i32, i32) {
    %c0_i32 = arith.constant 0 : i32
    %c0_i32_0 = arith.constant 0 : i32
    %c0_i32_1 = arith.constant 0 : i32
    return %c0_i32, %c0_i32_0 : i32, i32
  }
  func.func @transform_3(%arg0: i32) -> (i32, i32) {
    %c0_i32 = arith.constant 0 : i32
    %c0_i32_0 = arith.constant 0 : i32
    %c0_i32_1 = arith.constant 0 : i32
    return %c0_i32, %c0_i32_0 : i32, i32
  }
  func.func @transform_4(%arg0: i32) -> (i32, i32, i32) {
    %c0_i32 = arith.constant 0 : i32
    %c0_i32_0 = arith.constant 0 : i32
    %c0_i32_1 = arith.constant 0 : i32
    return %arg0, %c0_i32, %c0_i32_0 : i32, i32, i32
  }
}

</mosaic_0001>

<llo_original>
// kernel: basic_conv2d_bn.1
$region0: #{basic_conv2d_bn.1}
  #allocation0 [shape = 'u32[]', space=smem, size = 0x4, offset = 0x4, fixed_abs, tag = 'smem constant byte address 0x4 - core index']
  #allocation1 [shape = 'u32[144,128]{1,0:T(1,128)}', space=vmem, size = 0x12000, scoped, tag = 'internal scratch']
  #allocation2 [shape = 'f32[8,16,36]{2,1,0:T(8,128)}', space=vmem, size = 0x10000, scoped, tag = 'scratch operand']
  %s0 = inlined_call_operand.vmem [shape: f32[4,10,18,4], index: 0, kind: input, shape index: {}]
  %s1 = inlined_call_operand.vmem [shape: f32[36,128], index: 1, kind: input, shape index: {}]
  %s2 = inlined_call_operand.vmem [shape: f32[1,128], index: 2, kind: input, shape index: {}]
  %s3 = inlined_call_operand.vmem [shape: f32[1,128], index: 3, kind: input, shape index: {}]
  %s4 = inlined_call_operand.vmem [shape: f32[4,128,128], index: 4, kind: output, shape index: {}]
  %s5 = sld [smem:[#allocation0]]
  $region49: #{basic_conv2d_bn.1} parent=0
    _
  %s7 = ssub.s32 1, %s5
  %s8 = scalar_select 0, %s7, %s5
  loop: start=0, step=1, limit=6
  $region2: #{basic_conv2d_bn.1} parent=0 // loop_pre_header
    _
  $region3: #{basic_conv2d_bn.1} parent=0 // loop_header
    %s10 = sphi 0, %s14
    %p11 = scmp.ge.s32.totalorder %s10, 6
    %s20 = sphi 0, %s22
    %s23 = sphi 0, %s20
    %s24 = sphi 0, %s23
    %s40 = sphi 0, %s24
    %s44 = sphi 0, %s44
    %s46 = sphi 0, %s44
    %s47 = sphi 0, %s46
    %s61 = sphi 0, %s47
    %s65 = sphi 0, %s65
    %s67 = sphi 0, %s65
    %s68 = sphi 0, %s67
    %s82 = sphi 0, %s68
    %s86 = sphi 0, %s86
    %s88 = sphi 0, %s86
    %s89 = sphi 0, %s88
    %s103 = sphi 0, %s89
    %s109 = sphi 0, %s111
    %s112 = sphi 0, %s109
    %s113 = sphi 0, %s112
    %s129 = sphi 0, %s113
  $region4: #{basic_conv2d_bn.1} parent=0 // loop_header_branch
    %13 = sbr.rel (%p11) target = $region8
  $region5: #{basic_conv2d_bn.1} parent=0 // loop_body
    %s15 = ssub.s32 %s10, 1
    %s16 = ssub.s32 %s10, 2
    %s17 = sadd.s32 %s10, 1
    %s18 = ssub.s32 %s10, %s17
    %p19 = scmp.eq.s32.totalorder %s18, 0
    %s21 = sadd.s32 %s20, 1
    %s22 = scalar_select %p19, %s20, %s21
    %p25 = pneg %p19
    %p26 = scmp.eq.s32.totalorder %s10, 3
    %p27 = por %p25, %p26
    %p28 = scmp.ne.s32.totalorder %s20, %s23
    %p29 = scmp.eq.s32.totalorder %s10, 0
    %p30 = por %p28, %p29
    %p31 = scmp.ne.s32.totalorder %s20, %s23
    %p32 = scmp.eq.s32.totalorder %s15, 3
    %p33 = por %p31, %p32
    %p34 = scmp.ne.s32.totalorder %s23, %s24
    %p35 = scmp.eq.s32.totalorder %s15, 0
    %p36 = por %p34, %p35
    %p37 = scmp.ne.s32.totalorder %s23, %s24
    %p38 = scmp.eq.s32.totalorder %s16, 3
    %p39 = por %p37, %p38
    %p41 = scmp.ne.s32.totalorder %s24, %s40
    %p42 = scmp.eq.s32.totalorder %s16, 0
    %p43 = por %p41, %p42
    %s45 = sadd.s32 %s44, 1
    %p48 = scmp.eq.s32.totalorder %s10, 3
    %p49 = scmp.ne.s32.totalorder %s44, %s46
    %p50 = scmp.eq.s32.totalorder %s10, 0
    %p51 = por %p49, %p50
    %p52 = scmp.ne.s32.totalorder %s44, %s46
    %p53 = scmp.eq.s32.totalorder %s15, 3
    %p54 = por %p52, %p53
    %p55 = scmp.ne.s32.totalorder %s46, %s47
    %p56 = scmp.eq.s32.totalorder %s15, 0
    %p57 = por %p55, %p56
    %p58 = scmp.ne.s32.totalorder %s46, %s47
    %p59 = scmp.eq.s32.totalorder %s16, 3
    %p60 = por %p58, %p59
    %p62 = scmp.ne.s32.totalorder %s47, %s61
    %p63 = scmp.eq.s32.totalorder %s16, 0
    %p64 = por %p62, %p63
    %s66 = sadd.s32 %s65, 1
    %p69 = scmp.eq.s32.totalorder %s10, 3
    %p70 = scmp.ne.s32.totalorder %s65, %s67
    %p71 = scmp.eq.s32.totalorder %s10, 0
    %p72 = por %p70, %p71
    %p73 = scmp.ne.s32.totalorder %s65, %s67
    %p74 = scmp.eq.s32.totalorder %s15, 3
    %p75 = por %p73, %p74
    %p76 = scmp.ne.s32.totalorder %s67, %s68
    %p77 = scmp.eq.s32.totalorder %s15, 0
    %p78 = por %p76, %p77
    %p79 = scmp.ne.s32.totalorder %s67, %s68
    %p80 = scmp.eq.s32.totalorder %s16, 3
    %p81 = por %p79, %p80
    %p83 = scmp.ne.s32.totalorder %s68, %s82
    %p84 = scmp.eq.s32.totalorder %s16, 0
    %p85 = por %p83, %p84
    %s87 = sadd.s32 %s86, 1
    %p90 = scmp.eq.s32.totalorder %s10, 3
    %p91 = scmp.ne.s32.totalorder %s86, %s88
    %p92 = scmp.eq.s32.totalorder %s10, 0
    %p93 = por %p91, %p92
    %p94 = scmp.ne.s32.totalorder %s86, %s88
    %p95 = scmp.eq.s32.totalorder %s15, 3
    %p96 = por %p94, %p95
    %p97 = scmp.ne.s32.totalorder %s88, %s89
    %p98 = scmp.eq.s32.totalorder %s15, 0
    %p99 = por %p97, %p98
    %p100 = scmp.ne.s32.totalorder %s88, %s89
    %p101 = scmp.eq.s32.totalorder %s16, 3
    %p102 = por %p100, %p101
    %p104 = scmp.ne.s32.totalorder %s89, %s103
    %p105 = scmp.eq.s32.totalorder %s16, 0
    %p106 = por %p104, %p105
    %s107 = ssub.s32 %s10, %s17
    %p108 = scmp.eq.s32.totalorder %s107, 0
    %s110 = sadd.s32 %s109, 1
    %s111 = scalar_select %p108, %s109, %s110
    %p114 = pneg %p108
    %p115 = scmp.eq.s32.totalorder %s10, 3
    %p116 = por %p114, %p115
    %p117 = scmp.ne.s32.totalorder %s109, %s112
    %p118 = scmp.eq.s32.totalorder %s10, 0
    %p119 = por %p117, %p118
    %p120 = scmp.ne.s32.totalorder %s109, %s112
    %p121 = scmp.eq.s32.totalorder %s15, 3
    %p122 = por %p120, %p121
    %p123 = scmp.ne.s32.totalorder %s112, %s113
    %p124 = scmp.eq.s32.totalorder %s15, 0
    %p125 = por %p123, %p124
    %p126 = scmp.ne.s32.totalorder %s112, %s113
    %p127 = scmp.eq.s32.totalorder %s16, 3
    %p128 = por %p126, %p127
    %p130 = scmp.ne.s32.totalorder %s113, %s129
    %p131 = scmp.eq.s32.totalorder %s16, 0
    %p132 = por %p130, %p131
    %p133 = scmp.le.s32.totalorder 1, %s10
    %p134 = scmp.lt.s32.totalorder %s10, 5
    %p135 = pnand %p133, %p134
    %p136 = pneg %p135
    // Predicated region
    $region9: #{basic_conv2d_bn.1} parent=5 // pred_check
      _
    $region10: #{basic_conv2d_bn.1} parent=5 // pred_check_branch
      %138 = sbr.rel (%p135) target = $region12
    $region11: #{basic_conv2d_bn.1} parent=5 // pred_region
      %s139 = ssub.s32 %s10, 1
      // Predicated region
      $region13: #{basic_conv2d_bn.1} parent=11 // pred_check
        %p140 = pneg %p57
      $region14: #{basic_conv2d_bn.1} parent=11 // pred_check_branch
        %142 = sbr.rel (%p140) target = $region16
      $region15: #{basic_conv2d_bn.1} parent=11 // pred_region
        _
      $region16: #{basic_conv2d_bn.1} parent=11 // pred_fallthru
        _
      // Predicated region
      $region17: #{basic_conv2d_bn.1} parent=11 // pred_check
        %p143 = pneg %p78
      $region18: #{basic_conv2d_bn.1} parent=11 // pred_check_branch
        %145 = sbr.rel (%p143) target = $region20
      $region19: #{basic_conv2d_bn.1} parent=11 // pred_region
        _
      $region20: #{basic_conv2d_bn.1} parent=11 // pred_fallthru
        _
      // Predicated region
      $region21: #{basic_conv2d_bn.1} parent=11 // pred_check
        %p146 = pneg %p99
      $region22: #{basic_conv2d_bn.1} parent=11 // pred_check_branch
        %148 = sbr.rel (%p146) target = $region24
      $region23: #{basic_conv2d_bn.1} parent=11 // pred_region
        _
      $region24: #{basic_conv2d_bn.1} parent=11 // pred_fallthru
        _
    $region12: #{basic_conv2d_bn.1} parent=5 // pred_fallthru
      _
    %p149 = scmp.lt.s32.totalorder %s10, 4
    // Predicated region
    $region25: #{basic_conv2d_bn.1} parent=5 // pred_check
      %p150 = pneg %p149
    $region26: #{basic_conv2d_bn.1} parent=5 // pred_check_branch
      %152 = sbr.rel (%p150) target = $region28
    $region27: #{basic_conv2d_bn.1} parent=5 // pred_region
      // Predicated region
      $region29: #{basic_conv2d_bn.1} parent=27 // pred_check
        %p153 = pneg %p30
      $region30: #{basic_conv2d_bn.1} parent=27 // pred_check_branch
        %155 = sbr.rel (%p153) target = $region32
      $region31: #{basic_conv2d_bn.1} parent=27 // pred_region
        %p156 = scmp.lt.s32.totalorder %s10, 3
        %s157 = scalar_select %p156, %s10, 3
        %s158 = smul.addr %s157, 30
        %s159 = smul.addr %s158, 8
        %s160 = scalar_lea.vmem %s0, %s159
      $region32: #{basic_conv2d_bn.1} parent=27 // pred_fallthru
        _
    $region28: #{basic_conv2d_bn.1} parent=5 // pred_fallthru
      _
    %p161 = scmp.le.s32.totalorder 1, %s10
    %p162 = scmp.lt.s32.totalorder %s10, 5
    %p163 = pnand %p161, %p162
    %p164 = pneg %p163
    // Predicated region
    $region33: #{basic_conv2d_bn.1} parent=5 // pred_check
      _
    $region34: #{basic_conv2d_bn.1} parent=5 // pred_check_branch
      %166 = sbr.rel (%p163) target = $region36
    $region35: #{basic_conv2d_bn.1} parent=5 // pred_region
      %s167 = ssub.s32 %s10, 1
      %p168 = scmp.lt.s32.totalorder %s15, 3
      %s169 = scalar_select %p168, %s15, 3
      %s170 = smul.addr %s169, 30
      %s171 = smul.addr %s170, 8
      %s172 = scalar_lea.vmem %s0, %s171
      %p173 = pneg %p36
      %p174 = pneg %p33
      %p175 = pneg %p57
      %p176 = pneg %p54
      %p177 = pneg %p78
      %p178 = pneg %p75
      %p179 = pneg %p99
      %p180 = pneg %p96
      %p181 = pneg %p125
      %p182 = pneg %p122
      %p183 = scmp.lt.s32.totalorder %s15, 3
      %s184 = scalar_select %p183, %s15, 3
      %s185 = smul.addr %s184, 16
      %s186 = smul.addr %s185, 8
      %s187 = scalar_lea.vmem %s4, %s186
      %p188 = scmp.lt.s32.totalorder %s15, 3
      %s189 = scalar_select %p188, %s15, 3
      %s190 = smul.addr %s189, 30
      %s191 = smul.addr %s190, 8
      %s192 = scalar_lea.vmem %s0, %s191
      %p193 = scmp.lt.s32.totalorder %s15, 3
      %s194 = scalar_select %p193, %s15, 3
      %s195 = smul.addr %s194, 16
      %s196 = smul.addr %s195, 8
      %s197 = scalar_lea.vmem %s4, %s196
      %v198 = vld [vmem:[%s192] sm:$0xff]
      %v199 = vld [vmem:[%s192 + $0x8] sm:$0xff]
      %v200 = vld [vmem:[%s192 + $0x10] sm:$0x3]
      %v201 = vld [vmem:[%s192 + $0x18] sm:$0xff]
      %v202 = vld [vmem:[%s192 + $0x20] sm:$0xff]
      %v203 = vld [vmem:[%s192 + $0x28] sm:$0x3]
      %v204 = vld [vmem:[%s192 + $0x30] sm:$0xff]
      %v205 = vld [vmem:[%s192 + $0x38] sm:$0xff]
      %v206 = vld [vmem:[%s192 + $0x40] sm:$0x3]
      %v207 = vld [vmem:[%s192 + $0x48] sm:$0xff]
      %v208 = vld [vmem:[%s192 + $0x50] sm:$0xff]
      %v209 = vld [vmem:[%s192 + $0x58] sm:$0x3]
      %v210 = vld [vmem:[%s192 + $0x60] sm:$0xff]
      %v211 = vld [vmem:[%s192 + $0x68] sm:$0xff]
      %v212 = vld [vmem:[%s192 + $0x70] sm:$0x3]
      %v213 = vld [vmem:[%s192 + $0x78] sm:$0xff]
      %v214 = vld [vmem:[%s192 + $0x80] sm:$0xff]
      %v215 = vld [vmem:[%s192 + $0x88] sm:$0x3]
      %v216 = vld [vmem:[%s192 + $0x90] sm:$0xff]
      %v217 = vld [vmem:[%s192 + $0x98] sm:$0xff]
      %v218 = vld [vmem:[%s192 + $0xa0] sm:$0x3]
      %v219 = vld [vmem:[%s192 + $0xa8] sm:$0xff]
      %v220 = vld [vmem:[%s192 + $0xb0] sm:$0xff]
      %v221 = vld [vmem:[%s192 + $0xb8] sm:$0x3]
      %v222 = vld [vmem:[%s192 + $0xc0] sm:$0xff]
      %v223 = vld [vmem:[%s192 + $0xc8] sm:$0xff]
      %v224 = vld [vmem:[%s192 + $0xd0] sm:$0x3]
      %v225 = vld [vmem:[%s192 + $0xd8] sm:$0xff]
      %v226 = vld [vmem:[%s192 + $0xe0] sm:$0xff]
      %v227 = vld [vmem:[%s192 + $0xe8] sm:$0x3]
      %vm228 = vcmask 31744
      %229 = vst.msk [vmem:[#allocation2] sm:$0xff] %vm228, %v198
      %230 = vst.msk [vmem:[#allocation2 + $0x8] sm:$0xff] %vm228, %v199
      %231 = vst.msk [vmem:[#allocation2 + $0x10] sm:$0xff] %vm228, %v201
      %232 = vst.msk [vmem:[#allocation2 + $0x18] sm:$0xff] %vm228, %v202
      %233 = vst.msk [vmem:[#allocation2 + $0x20] sm:$0xff] %vm228, %v204
      %234 = vst.msk [vmem:[#allocation2 + $0x28] sm:$0xff] %vm228, %v205
      %235 = vst.msk [vmem:[#allocation2 + $0x30] sm:$0xff] %vm228, %v207
      %236 = vst.msk [vmem:[#allocation2 + $0x38] sm:$0xff] %vm228, %v208
      %237 = vst.msk [vmem:[#allocation2 + $0x40] sm:$0xff] %vm228, %v210
      %238 = vst.msk [vmem:[#allocation2 + $0x48] sm:$0xff] %vm228, %v211
      %239 = vst.msk [vmem:[#allocation2 + $0x50] sm:$0xff] %vm228, %v213
      %240 = vst.msk [vmem:[#allocation2 + $0x58] sm:$0xff] %vm228, %v214
      %241 = vst.msk [vmem:[#allocation2 + $0x60] sm:$0xff] %vm228, %v216
      %242 = vst.msk [vmem:[#allocation2 + $0x68] sm:$0xff] %vm228, %v217
      %243 = vst.msk [vmem:[#allocation2 + $0x70] sm:$0xff] %vm228, %v219
      %244 = vst.msk [vmem:[#allocation2 + $0x78] sm:$0xff] %vm228, %v220
      %269 = vrot.lane.b32.xlu0 %v198, 4
      %v270 = vpop.permute.xlu0 %269
      %271 = vrot.lane.b32.xlu0 %v199, 4
      %v272 = vpop.permute.xlu0 %271
      %273 = vrot.lane.b32.xlu0 %v200, 4
      %v274 = vpop.permute.xlu0 %273
      %275 = vrot.lane.b32.xlu0 %v201, 4
      %v276 = vpop.permute.xlu0 %275
      %277 = vrot.lane.b32.xlu0 %v202, 4
      %v278 = vpop.permute.xlu0 %277
      %279 = vrot.lane.b32.xlu0 %v203, 4
      %v280 = vpop.permute.xlu0 %279
      %281 = vrot.lane.b32.xlu0 %v204, 4
      %v282 = vpop.permute.xlu0 %281
      %283 = vrot.lane.b32.xlu0 %v205, 4
      %v284 = vpop.permute.xlu0 %283
      %285 = vrot.lane.b32.xlu0 %v206, 4
      %v286 = vpop.permute.xlu0 %285
      %287 = vrot.lane.b32.xlu0 %v207, 4
      %v288 = vpop.permute.xlu0 %287
      %289 = vrot.lane.b32.xlu0 %v208, 4
      %v290 = vpop.permute.xlu0 %289
      %291 = vrot.lane.b32.xlu0 %v209, 4
      %v292 = vpop.permute.xlu0 %291
      %293 = vrot.lane.b32.xlu0 %v210, 4
      %v294 = vpop.permute.xlu0 %293
      %295 = vrot.lane.b32.xlu0 %v211, 4
      %v296 = vpop.permute.xlu0 %295
      %297 = vrot.lane.b32.xlu0 %v212, 4
      %v298 = vpop.permute.xlu0 %297
      %299 = vrot.lane.b32.xlu0 %v213, 4
      %v300 = vpop.permute.xlu0 %299
      %301 = vrot.lane.b32.xlu0 %v214, 4
      %v302 = vpop.permute.xlu0 %301
      %303 = vrot.lane.b32.xlu0 %v215, 4
      %v304 = vpop.permute.xlu0 %303
      %305 = vrot.lane.b32.xlu0 %v216, 4
      %v306 = vpop.permute.xlu0 %305
      %307 = vrot.lane.b32.xlu0 %v217, 4
      %v308 = vpop.permute.xlu0 %307
      %309 = vrot.lane.b32.xlu0 %v218, 4
      %v310 = vpop.permute.xlu0 %309
      %311 = vrot.lane.b32.xlu0 %v219, 4
      %v312 = vpop.permute.xlu0 %311
      %313 = vrot.lane.b32.xlu0 %v220, 4
      %v314 = vpop.permute.xlu0 %313
      %315 = vrot.lane.b32.xlu0 %v221, 4
      %v316 = vpop.permute.xlu0 %315
      %vm341 = vcmask 64545
      %342 = vst.msk [vmem:[#allocation2 - $0x1] sm:$0xfe] %vm341, %v270
      %vm343 = vcmask 64544
      %344 = vst.msk [vmem:[#allocation2 + $0x7] sm:$0xff] %vm343, %v272
      %vm345 = vcmask 57376
      %346 = vst.msk [vmem:[#allocation2 + $0xf] sm:$0x1] %vm345, %v274
      %347 = vst.msk [vmem:[#allocation2 + $0xf] sm:$0xfe] %vm341, %v276
      %348 = vst.msk [vmem:[#allocation2 + $0x17] sm:$0xff] %vm343, %v278
      %349 = vst.msk [vmem:[#allocation2 + $0x1f] sm:$0x1] %vm345, %v280
      %350 = vst.msk [vmem:[#allocation2 + $0x1f] sm:$0xfe] %vm341, %v282
      %351 = vst.msk [vmem:[#allocation2 + $0x27] sm:$0xff] %vm343, %v284
      %352 = vst.msk [vmem:[#allocation2 + $0x2f] sm:$0x1] %vm345, %v286
      %353 = vst.msk [vmem:[#allocation2 + $0x2f] sm:$0xfe] %vm341, %v288
      %354 = vst.msk [vmem:[#allocation2 + $0x37] sm:$0xff] %vm343, %v290
      %355 = vst.msk [vmem:[#allocation2 + $0x3f] sm:$0x1] %vm345, %v292
      %356 = vst.msk [vmem:[#allocation2 + $0x3f] sm:$0xfe] %vm341, %v294
      %357 = vst.msk [vmem:[#allocation2 + $0x47] sm:$0xff] %vm343, %v296
      %358 = vst.msk [vmem:[#allocation2 + $0x4f] sm:$0x1] %vm345, %v298
      %359 = vst.msk [vmem:[#allocation2 + $0x4f] sm:$0xfe] %vm341, %v300
      %360 = vst.msk [vmem:[#allocation2 + $0x57] sm:$0xff] %vm343, %v302
      %361 = vst.msk [vmem:[#allocation2 + $0x5f] sm:$0x1] %vm345, %v304
      %362 = vst.msk [vmem:[#allocation2 + $0x5f] sm:$0xfe] %vm341, %v306
      %363 = vst.msk [vmem:[#allocation2 + $0x67] sm:$0xff] %vm343, %v308
      %364 = vst.msk [vmem:[#allocation2 + $0x6f] sm:$0x1] %vm345, %v310
      %365 = vst.msk [vmem:[#allocation2 + $0x6f] sm:$0xfe] %vm341, %v312
      %366 = vst.msk [vmem:[#allocation2 + $0x77] sm:$0xff] %vm343, %v314
      %367 = vst.msk [vmem:[#allocation2 + $0x7f] sm:$0x1] %vm345, %v316
      %368 = vrot.lane.b32.xlu0 %v198, 8
      %v369 = vpop.permute.xlu0 %368
      %370 = vrot.lane.b32.xlu0 %v199, 8
      %v371 = vpop.permute.xlu0 %370
      %372 = vrot.lane.b32.xlu0 %v200, 8
      %v373 = vpop.permute.xlu0 %372
      %374 = vrot.lane.b32.xlu0 %v201, 8
      %v375 = vpop.permute.xlu0 %374
      %376 = vrot.lane.b32.xlu0 %v202, 8
      %v377 = vpop.permute.xlu0 %376
      %378 = vrot.lane.b32.xlu0 %v203, 8
      %v379 = vpop.permute.xlu0 %378
      %380 = vrot.lane.b32.xlu0 %v204, 8
      %v381 = vpop.permute.xlu0 %380
      %382 = vrot.lane.b32.xlu0 %v205, 8
      %v383 = vpop.permute.xlu0 %382
      %384 = vrot.lane.b32.xlu0 %v206, 8
      %v385 = vpop.permute.xlu0 %384
      %386 = vrot.lane.b32.xlu0 %v207, 8
      %v387 = vpop.permute.xlu0 %386
      %388 = vrot.lane.b32.xlu0 %v208, 8
      %v389 = vpop.permute.xlu0 %388
      %390 = vrot.lane.b32.xlu0 %v209, 8
      %v391 = vpop.permute.xlu0 %390
      %392 = vrot.lane.b32.xlu0 %v210, 8
      %v393 = vpop.permute.xlu0 %392
      %394 = vrot.lane.b32.xlu0 %v211, 8
      %v395 = vpop.permute.xlu0 %394
      %396 = vrot.lane.b32.xlu0 %v212, 8
      %v397 = vpop.permute.xlu0 %396
      %398 = vrot.lane.b32.xlu0 %v213, 8
      %v399 = vpop.permute.xlu0 %398
      %400 = vrot.lane.b32.xlu0 %v214, 8
      %v401 = vpop.permute.xlu0 %400
      %402 = vrot.lane.b32.xlu0 %v215, 8
      %v403 = vpop.permute.xlu0 %402
      %404 = vrot.lane.b32.xlu0 %v216, 8
      %v405 = vpop.permute.xlu0 %404
      %406 = vrot.lane.b32.xlu0 %v217, 8
      %v407 = vpop.permute.xlu0 %406
      %408 = vrot.lane.b32.xlu0 %v218, 8
      %v409 = vpop.permute.xlu0 %408
      %410 = vrot.lane.b32.xlu0 %v219, 8
      %v411 = vpop.permute.xlu0 %410
      %412 = vrot.lane.b32.xlu0 %v220, 8
      %v413 = vpop.permute.xlu0 %412
      %414 = vrot.lane.b32.xlu0 %v221, 8
      %v415 = vpop.permute.xlu0 %414
      %vm440 = vcmask 97346
      %441 = vst.msk [vmem:[#allocation2 - $0x2] sm:$0xfc] %vm440, %v369
      %vm442 = vcmask 97344
      %443 = vst.msk [vmem:[#allocation2 + $0x6] sm:$0xff] %vm442, %v371
      %vm444 = vcmask 91200
      %445 = vst.msk [vmem:[#allocation2 + $0xe] sm:$0x3] %vm444, %v373
      %446 = vst.msk [vmem:[#allocation2 + $0xe] sm:$0xfc] %vm440, %v375
      %447 = vst.msk [vmem:[#allocation2 + $0x16] sm:$0xff] %vm442, %v377
      %448 = vst.msk [vmem:[#allocation2 + $0x1e] sm:$0x3] %vm444, %v379
      %449 = vst.msk [vmem:[#allocation2 + $0x1e] sm:$0xfc] %vm440, %v381
      %450 = vst.msk [vmem:[#allocation2 + $0x26] sm:$0xff] %vm442, %v383
      %451 = vst.msk [vmem:[#allocation2 + $0x2e] sm:$0x3] %vm444, %v385
      %452 = vst.msk [vmem:[#allocation2 + $0x2e] sm:$0xfc] %vm440, %v387
      %453 = vst.msk [vmem:[#allocation2 + $0x36] sm:$0xff] %vm442, %v389
      %454 = vst.msk [vmem:[#allocation2 + $0x3e] sm:$0x3] %vm444, %v391
      %455 = vst.msk [vmem:[#allocation2 + $0x3e] sm:$0xfc] %vm440, %v393
      %456 = vst.msk [vmem:[#allocation2 + $0x46] sm:$0xff] %vm442, %v395
      %457 = vst.msk [vmem:[#allocation2 + $0x4e] sm:$0x3] %vm444, %v397
      %458 = vst.msk [vmem:[#allocation2 + $0x4e] sm:$0xfc] %vm440, %v399
      %459 = vst.msk [vmem:[#allocation2 + $0x56] sm:$0xff] %vm442, %v401
      %460 = vst.msk [vmem:[#allocation2 + $0x5e] sm:$0x3] %vm444, %v403
      %461 = vst.msk [vmem:[#allocation2 + $0x5e] sm:$0xfc] %vm440, %v405
      %462 = vst.msk [vmem:[#allocation2 + $0x66] sm:$0xff] %vm442, %v407
      %463 = vst.msk [vmem:[#allocation2 + $0x6e] sm:$0x3] %vm444, %v409
      %464 = vst.msk [vmem:[#allocation2 + $0x6e] sm:$0xfc] %vm440, %v411
      %465 = vst.msk [vmem:[#allocation2 + $0x76] sm:$0xff] %vm442, %v413
      %466 = vst.msk [vmem:[#allocation2 + $0x7e] sm:$0x3] %vm444, %v415
      %469 = vrot.lane.b32.xlu0 %v201, 12
      %v470 = vpop.permute.xlu0 %469
      %471 = vrot.lane.b32.xlu0 %v202, 12
      %v472 = vpop.permute.xlu0 %471
      %473 = vrot.lane.b32.xlu0 %v204, 12
      %v474 = vpop.permute.xlu0 %473
      %475 = vrot.lane.b32.xlu0 %v205, 12
      %v476 = vpop.permute.xlu0 %475
      %477 = vrot.lane.b32.xlu0 %v207, 12
      %v478 = vpop.permute.xlu0 %477
      %479 = vrot.lane.b32.xlu0 %v208, 12
      %v480 = vpop.permute.xlu0 %479
      %481 = vrot.lane.b32.xlu0 %v210, 12
      %v482 = vpop.permute.xlu0 %481
      %483 = vrot.lane.b32.xlu0 %v211, 12
      %v484 = vpop.permute.xlu0 %483
      %485 = vrot.lane.b32.xlu0 %v213, 12
      %v486 = vpop.permute.xlu0 %485
      %487 = vrot.lane.b32.xlu0 %v214, 12
      %v488 = vpop.permute.xlu0 %487
      %489 = vrot.lane.b32.xlu0 %v216, 12
      %v490 = vpop.permute.xlu0 %489
      %491 = vrot.lane.b32.xlu0 %v217, 12
      %v492 = vpop.permute.xlu0 %491
      %493 = vrot.lane.b32.xlu0 %v219, 12
      %v494 = vpop.permute.xlu0 %493
      %495 = vrot.lane.b32.xlu0 %v220, 12
      %v496 = vpop.permute.xlu0 %495
      %497 = vrot.lane.b32.xlu0 %v222, 12
      %v498 = vpop.permute.xlu0 %497
      %499 = vrot.lane.b32.xlu0 %v223, 12
      %v500 = vpop.permute.xlu0 %499
      %vm517 = vcmask 130144
      %518 = vst.msk [vmem:[#allocation2] sm:$0xff] %vm517, %v470
      %519 = vst.msk [vmem:[#allocation2 + $0x8] sm:$0xff] %vm517, %v472
      %520 = vst.msk [vmem:[#allocation2 + $0x10] sm:$0xff] %vm517, %v474
      %521 = vst.msk [vmem:[#allocation2 + $0x18] sm:$0xff] %vm517, %v476
      %522 = vst.msk [vmem:[#allocation2 + $0x20] sm:$0xff] %vm517, %v478
      %523 = vst.msk [vmem:[#allocation2 + $0x28] sm:$0xff] %vm517, %v480
      %524 = vst.msk [vmem:[#allocation2 + $0x30] sm:$0xff] %vm517, %v482
      %525 = vst.msk [vmem:[#allocation2 + $0x38] sm:$0xff] %vm517, %v484
      %526 = vst.msk [vmem:[#allocation2 + $0x40] sm:$0xff] %vm517, %v486
      %527 = vst.msk [vmem:[#allocation2 + $0x48] sm:$0xff] %vm517, %v488
      %528 = vst.msk [vmem:[#allocation2 + $0x50] sm:$0xff] %vm517, %v490
      %529 = vst.msk [vmem:[#allocation2 + $0x58] sm:$0xff] %vm517, %v492
      %530 = vst.msk [vmem:[#allocation2 + $0x60] sm:$0xff] %vm517, %v494
      %531 = vst.msk [vmem:[#allocation2 + $0x68] sm:$0xff] %vm517, %v496
      %532 = vst.msk [vmem:[#allocation2 + $0x70] sm:$0xff] %vm517, %v498
      %533 = vst.msk [vmem:[#allocation2 + $0x78] sm:$0xff] %vm517, %v500
      %535 = vrot.lane.b32.xlu0 %v201, 16
      %v536 = vpop.permute.xlu0 %535
      %537 = vrot.lane.b32.xlu0 %v202, 16
      %v538 = vpop.permute.xlu0 %537
      %539 = vrot.lane.b32.xlu0 %v203, 16
      %v540 = vpop.permute.xlu0 %539
      %541 = vrot.lane.b32.xlu0 %v204, 16
      %v542 = vpop.permute.xlu0 %541
      %543 = vrot.lane.b32.xlu0 %v205, 16
      %v544 = vpop.permute.xlu0 %543
      %545 = vrot.lane.b32.xlu0 %v206, 16
      %v546 = vpop.permute.xlu0 %545
      %547 = vrot.lane.b32.xlu0 %v207, 16
      %v548 = vpop.permute.xlu0 %547
      %549 = vrot.lane.b32.xlu0 %v208, 16
      %v550 = vpop.permute.xlu0 %549
      %551 = vrot.lane.b32.xlu0 %v209, 16
      %v552 = vpop.permute.xlu0 %551
      %553 = vrot.lane.b32.xlu0 %v210, 16
      %v554 = vpop.permute.xlu0 %553
      %555 = vrot.lane.b32.xlu0 %v211, 16
      %v556 = vpop.permute.xlu0 %555
      %557 = vrot.lane.b32.xlu0 %v212, 16
      %v558 = vpop.permute.xlu0 %557
      %559 = vrot.lane.b32.xlu0 %v213, 16
      %v560 = vpop.permute.xlu0 %559
      %561 = vrot.lane.b32.xlu0 %v214, 16
      %v562 = vpop.permute.xlu0 %561
      %563 = vrot.lane.b32.xlu0 %v215, 16
      %v564 = vpop.permute.xlu0 %563
      %565 = vrot.lane.b32.xlu0 %v216, 16
      %v566 = vpop.permute.xlu0 %565
      %567 = vrot.lane.b32.xlu0 %v217, 16
      %v568 = vpop.permute.xlu0 %567
      %569 = vrot.lane.b32.xlu0 %v218, 16
      %v570 = vpop.permute.xlu0 %569
      %571 = vrot.lane.b32.xlu0 %v219, 16
      %v572 = vpop.permute.xlu0 %571
      %573 = vrot.lane.b32.xlu0 %v220, 16
      %v574 = vpop.permute.xlu0 %573
      %575 = vrot.lane.b32.xlu0 %v221, 16
      %v576 = vpop.permute.xlu0 %575
      %577 = vrot.lane.b32.xlu0 %v222, 16
      %v578 = vpop.permute.xlu0 %577
      %579 = vrot.lane.b32.xlu0 %v223, 16
      %v580 = vpop.permute.xlu0 %579
      %581 = vrot.lane.b32.xlu0 %v224, 16
      %v582 = vpop.permute.xlu0 %581
      %vm607 = vcmask 162945
      %608 = vst.msk [vmem:[#allocation2 - $0x1] sm:$0xfe] %vm607, %v536
      %vm609 = vcmask 162944
      %610 = vst.msk [vmem:[#allocation2 + $0x7] sm:$0xff] %vm609, %v538
      %vm611 = vcmask 155776
      %612 = vst.msk [vmem:[#allocation2 + $0xf] sm:$0x1] %vm611, %v540
      %613 = vst.msk [vmem:[#allocation2 + $0xf] sm:$0xfe] %vm607, %v542
      %614 = vst.msk [vmem:[#allocation2 + $0x17] sm:$0xff] %vm609, %v544
      %615 = vst.msk [vmem:[#allocation2 + $0x1f] sm:$0x1] %vm611, %v546
      %616 = vst.msk [vmem:[#allocation2 + $0x1f] sm:$0xfe] %vm607, %v548
      %617 = vst.msk [vmem:[#allocation2 + $0x27] sm:$0xff] %vm609, %v550
      %618 = vst.msk [vmem:[#allocation2 + $0x2f] sm:$0x1] %vm611, %v552
      %619 = vst.msk [vmem:[#allocation2 + $0x2f] sm:$0xfe] %vm607, %v554
      %620 = vst.msk [vmem:[#allocation2 + $0x37] sm:$0xff] %vm609, %v556
      %621 = vst.msk [vmem:[#allocation2 + $0x3f] sm:$0x1] %vm611, %v558
      %622 = vst.msk [vmem:[#allocation2 + $0x3f] sm:$0xfe] %vm607, %v560
      %623 = vst.msk [vmem:[#allocation2 + $0x47] sm:$0xff] %vm609, %v562
      %624 = vst.msk [vmem:[#allocation2 + $0x4f] sm:$0x1] %vm611, %v564
      %625 = vst.msk [vmem:[#allocation2 + $0x4f] sm:$0xfe] %vm607, %v566
      %626 = vst.msk [vmem:[#allocation2 + $0x57] sm:$0xff] %vm609, %v568
      %627 = vst.msk [vmem:[#allocation2 + $0x5f] sm:$0x1] %vm611, %v570
      %628 = vst.msk [vmem:[#allocation2 + $0x5f] sm:$0xfe] %vm607, %v572
      %629 = vst.msk [vmem:[#allocation2 + $0x67] sm:$0xff] %vm609, %v574
      %630 = vst.msk [vmem:[#allocation2 + $0x6f] sm:$0x1] %vm611, %v576
      %631 = vst.msk [vmem:[#allocation2 + $0x6f] sm:$0xfe] %vm607, %v578
      %632 = vst.msk [vmem:[#allocation2 + $0x77] sm:$0xff] %vm609, %v580
      %633 = vst.msk [vmem:[#allocation2 + $0x7f] sm:$0x1] %vm611, %v582
      %634 = vrot.lane.b32.xlu0 %v201, 20
      %v635 = vpop.permute.xlu0 %634
      %636 = vrot.lane.b32.xlu0 %v202, 20
      %v637 = vpop.permute.xlu0 %636
      %638 = vrot.lane.b32.xlu0 %v203, 20
      %v639 = vpop.permute.xlu0 %638
      %640 = vrot.lane.b32.xlu0 %v204, 20
      %v641 = vpop.permute.xlu0 %640
      %642 = vrot.lane.b32.xlu0 %v205, 20
      %v643 = vpop.permute.xlu0 %642
      %644 = vrot.lane.b32.xlu0 %v206, 20
      %v645 = vpop.permute.xlu0 %644
      %646 = vrot.lane.b32.xlu0 %v207, 20
      %v647 = vpop.permute.xlu0 %646
      %648 = vrot.lane.b32.xlu0 %v208, 20
      %v649 = vpop.permute.xlu0 %648
      %650 = vrot.lane.b32.xlu0 %v209, 20
      %v651 = vpop.permute.xlu0 %650
      %652 = vrot.lane.b32.xlu0 %v210, 20
      %v653 = vpop.permute.xlu0 %652
      %654 = vrot.lane.b32.xlu0 %v211, 20
      %v655 = vpop.permute.xlu0 %654
      %656 = vrot.lane.b32.xlu0 %v212, 20
      %v657 = vpop.permute.xlu0 %656
      %658 = vrot.lane.b32.xlu0 %v213, 20
      %v659 = vpop.permute.xlu0 %658
      %660 = vrot.lane.b32.xlu0 %v214, 20
      %v661 = vpop.permute.xlu0 %660
      %662 = vrot.lane.b32.xlu0 %v215, 20
      %v663 = vpop.permute.xlu0 %662
      %664 = vrot.lane.b32.xlu0 %v216, 20
      %v665 = vpop.permute.xlu0 %664
      %666 = vrot.lane.b32.xlu0 %v217, 20
      %v667 = vpop.permute.xlu0 %666
      %668 = vrot.lane.b32.xlu0 %v218, 20
      %v669 = vpop.permute.xlu0 %668
      %670 = vrot.lane.b32.xlu0 %v219, 20
      %v671 = vpop.permute.xlu0 %670
      %672 = vrot.lane.b32.xlu0 %v220, 20
      %v673 = vpop.permute.xlu0 %672
      %674 = vrot.lane.b32.xlu0 %v221, 20
      %v675 = vpop.permute.xlu0 %674
      %676 = vrot.lane.b32.xlu0 %v222, 20
      %v677 = vpop.permute.xlu0 %676
      %678 = vrot.lane.b32.xlu0 %v223, 20
      %v679 = vpop.permute.xlu0 %678
      %680 = vrot.lane.b32.xlu0 %v224, 20
      %v681 = vpop.permute.xlu0 %680
      %vm706 = vcmask 195746
      %707 = vst.msk [vmem:[#allocation2 - $0x2] sm:$0xfc] %vm706, %v635
      %vm708 = vcmask 195744
      %709 = vst.msk [vmem:[#allocation2 + $0x6] sm:$0xff] %vm708, %v637
      %vm710 = vcmask 189600
      %711 = vst.msk [vmem:[#allocation2 + $0xe] sm:$0x3] %vm710, %v639
      %712 = vst.msk [vmem:[#allocation2 + $0xe] sm:$0xfc] %vm706, %v641
      %713 = vst.msk [vmem:[#allocation2 + $0x16] sm:$0xff] %vm708, %v643
      %714 = vst.msk [vmem:[#allocation2 + $0x1e] sm:$0x3] %vm710, %v645
      %715 = vst.msk [vmem:[#allocation2 + $0x1e] sm:$0xfc] %vm706, %v647
      %716 = vst.msk [vmem:[#allocation2 + $0x26] sm:$0xff] %vm708, %v649
      %717 = vst.msk [vmem:[#allocation2 + $0x2e] sm:$0x3] %vm710, %v651
      %718 = vst.msk [vmem:[#allocation2 + $0x2e] sm:$0xfc] %vm706, %v653
      %719 = vst.msk [vmem:[#allocation2 + $0x36] sm:$0xff] %vm708, %v655
      %720 = vst.msk [vmem:[#allocation2 + $0x3e] sm:$0x3] %vm710, %v657
      %721 = vst.msk [vmem:[#allocation2 + $0x3e] sm:$0xfc] %vm706, %v659
      %722 = vst.msk [vmem:[#allocation2 + $0x46] sm:$0xff] %vm708, %v661
      %723 = vst.msk [vmem:[#allocation2 + $0x4e] sm:$0x3] %vm710, %v663
      %724 = vst.msk [vmem:[#allocation2 + $0x4e] sm:$0xfc] %vm706, %v665
      %725 = vst.msk [vmem:[#allocation2 + $0x56] sm:$0xff] %vm708, %v667
      %726 = vst.msk [vmem:[#allocation2 + $0x5e] sm:$0x3] %vm710, %v669
      %727 = vst.msk [vmem:[#allocation2 + $0x5e] sm:$0xfc] %vm706, %v671
      %728 = vst.msk [vmem:[#allocation2 + $0x66] sm:$0xff] %vm708, %v673
      %729 = vst.msk [vmem:[#allocation2 + $0x6e] sm:$0x3] %vm710, %v675
      %730 = vst.msk [vmem:[#allocation2 + $0x6e] sm:$0xfc] %vm706, %v677
      %731 = vst.msk [vmem:[#allocation2 + $0x76] sm:$0xff] %vm708, %v679
      %732 = vst.msk [vmem:[#allocation2 + $0x7e] sm:$0x3] %vm710, %v681
      %735 = vrot.lane.b32.xlu0 %v204, 24
      %v736 = vpop.permute.xlu0 %735
      %737 = vrot.lane.b32.xlu0 %v205, 24
      %v738 = vpop.permute.xlu0 %737
      %739 = vrot.lane.b32.xlu0 %v207, 24
      %v740 = vpop.permute.xlu0 %739
      %741 = vrot.lane.b32.xlu0 %v208, 24
      %v742 = vpop.permute.xlu0 %741
      %743 = vrot.lane.b32.xlu0 %v210, 24
      %v744 = vpop.permute.xlu0 %743
      %745 = vrot.lane.b32.xlu0 %v211, 24
      %v746 = vpop.permute.xlu0 %745
      %747 = vrot.lane.b32.xlu0 %v213, 24
      %v748 = vpop.permute.xlu0 %747
      %749 = vrot.lane.b32.xlu0 %v214, 24
      %v750 = vpop.permute.xlu0 %749
      %751 = vrot.lane.b32.xlu0 %v216, 24
      %v752 = vpop.permute.xlu0 %751
      %753 = vrot.lane.b32.xlu0 %v217, 24
      %v754 = vpop.permute.xlu0 %753
      %755 = vrot.lane.b32.xlu0 %v219, 24
      %v756 = vpop.permute.xlu0 %755
      %757 = vrot.lane.b32.xlu0 %v220, 24
      %v758 = vpop.permute.xlu0 %757
      %759 = vrot.lane.b32.xlu0 %v222, 24
      %v760 = vpop.permute.xlu0 %759
      %761 = vrot.lane.b32.xlu0 %v223, 24
      %v762 = vpop.permute.xlu0 %761
      %763 = vrot.lane.b32.xlu0 %v225, 24
      %v764 = vpop.permute.xlu0 %763
      %765 = vrot.lane.b32.xlu0 %v226, 24
      %v766 = vpop.permute.xlu0 %765
      %vm783 = vcmask 228544
      %784 = vst.msk [vmem:[#allocation2] sm:$0xff] %vm783, %v736
      %785 = vst.msk [vmem:[#allocation2 + $0x8] sm:$0xff] %vm783, %v738
      %786 = vst.msk [vmem:[#allocation2 + $0x10] sm:$0xff] %vm783, %v740
      %787 = vst.msk [vmem:[#allocation2 + $0x18] sm:$0xff] %vm783, %v742
      %788 = vst.msk [vmem:[#allocation2 + $0x20] sm:$0xff] %vm783, %v744
      %789 = vst.msk [vmem:[#allocation2 + $0x28] sm:$0xff] %vm783, %v746
      %790 = vst.msk [vmem:[#allocation2 + $0x30] sm:$0xff] %vm783, %v748
      %791 = vst.msk [vmem:[#allocation2 + $0x38] sm:$0xff] %vm783, %v750
      %792 = vst.msk [vmem:[#allocation2 + $0x40] sm:$0xff] %vm783, %v752
      %793 = vst.msk [vmem:[#allocation2 + $0x48] sm:$0xff] %vm783, %v754
      %794 = vst.msk [vmem:[#allocation2 + $0x50] sm:$0xff] %vm783, %v756
      %795 = vst.msk [vmem:[#allocation2 + $0x58] sm:$0xff] %vm783, %v758
      %796 = vst.msk [vmem:[#allocation2 + $0x60] sm:$0xff] %vm783, %v760
      %797 = vst.msk [vmem:[#allocation2 + $0x68] sm:$0xff] %vm783, %v762
      %798 = vst.msk [vmem:[#allocation2 + $0x70] sm:$0xff] %vm783, %v764
      %799 = vst.msk [vmem:[#allocation2 + $0x78] sm:$0xff] %vm783, %v766
      %801 = vrot.lane.b32.xlu0 %v204, 28
      %v802 = vpop.permute.xlu0 %801
      %803 = vrot.lane.b32.xlu0 %v205, 28
      %v804 = vpop.permute.xlu0 %803
      %805 = vrot.lane.b32.xlu0 %v206, 28
      %v806 = vpop.permute.xlu0 %805
      %807 = vrot.lane.b32.xlu0 %v207, 28
      %v808 = vpop.permute.xlu0 %807
      %809 = vrot.lane.b32.xlu0 %v208, 28
      %v810 = vpop.permute.xlu0 %809
      %811 = vrot.lane.b32.xlu0 %v209, 28
      %v812 = vpop.permute.xlu0 %811
      %813 = vrot.lane.b32.xlu0 %v210, 28
      %v814 = vpop.permute.xlu0 %813
      %815 = vrot.lane.b32.xlu0 %v211, 28
      %v816 = vpop.permute.xlu0 %815
      %817 = vrot.lane.b32.xlu0 %v212, 28
      %v818 = vpop.permute.xlu0 %817
      %819 = vrot.lane.b32.xlu0 %v213, 28
      %v820 = vpop.permute.xlu0 %819
      %821 = vrot.lane.b32.xlu0 %v214, 28
      %v822 = vpop.permute.xlu0 %821
      %823 = vrot.lane.b32.xlu0 %v215, 28
      %v824 = vpop.permute.xlu0 %823
      %825 = vrot.lane.b32.xlu0 %v216, 28
      %v826 = vpop.permute.xlu0 %825
      %827 = vrot.lane.b32.xlu0 %v217, 28
      %v828 = vpop.permute.xlu0 %827
      %829 = vrot.lane.b32.xlu0 %v218, 28
      %v830 = vpop.permute.xlu0 %829
      %831 = vrot.lane.b32.xlu0 %v219, 28
      %v832 = vpop.permute.xlu0 %831
      %833 = vrot.lane.b32.xlu0 %v220, 28
      %v834 = vpop.permute.xlu0 %833
      %835 = vrot.lane.b32.xlu0 %v221, 28
      %v836 = vpop.permute.xlu0 %835
      %837 = vrot.lane.b32.xlu0 %v222, 28
      %v838 = vpop.permute.xlu0 %837
      %839 = vrot.lane.b32.xlu0 %v223, 28
      %v840 = vpop.permute.xlu0 %839
      %841 = vrot.lane.b32.xlu0 %v224, 28
      %v842 = vpop.permute.xlu0 %841
      %843 = vrot.lane.b32.xlu0 %v225, 28
      %v844 = vpop.permute.xlu0 %843
      %845 = vrot.lane.b32.xlu0 %v226, 28
      %v846 = vpop.permute.xlu0 %845
      %847 = vrot.lane.b32.xlu0 %v227, 28
      %v848 = vpop.permute.xlu0 %847
      %vm873 = vcmask 261345
      %874 = vst.msk [vmem:[#allocation2 - $0x1] sm:$0xfe] %vm873, %v802
      %vm875 = vcmask 261344
      %876 = vst.msk [vmem:[#allocation2 + $0x7] sm:$0xff] %vm875, %v804
      %vm877 = vcmask 254176
      %878 = vst.msk [vmem:[#allocation2 + $0xf] sm:$0x1] %vm877, %v806
      %879 = vst.msk [vmem:[#allocation2 + $0xf] sm:$0xfe] %vm873, %v808
      %880 = vst.msk [vmem:[#allocation2 + $0x17] sm:$0xff] %vm875, %v810
      %881 = vst.msk [vmem:[#allocation2 + $0x1f] sm:$0x1] %vm877, %v812
      %882 = vst.msk [vmem:[#allocation2 + $0x1f] sm:$0xfe] %vm873, %v814
      %883 = vst.msk [vmem:[#allocation2 + $0x27] sm:$0xff] %vm875, %v816
      %884 = vst.msk [vmem:[#allocation2 + $0x2f] sm:$0x1] %vm877, %v818
      %885 = vst.msk [vmem:[#allocation2 + $0x2f] sm:$0xfe] %vm873, %v820
      %886 = vst.msk [vmem:[#allocation2 + $0x37] sm:$0xff] %vm875, %v822
      %887 = vst.msk [vmem:[#allocation2 + $0x3f] sm:$0x1] %vm877, %v824
      %888 = vst.msk [vmem:[#allocation2 + $0x3f] sm:$0xfe] %vm873, %v826
      %889 = vst.msk [vmem:[#allocation2 + $0x47] sm:$0xff] %vm875, %v828
      %890 = vst.msk [vmem:[#allocation2 + $0x4f] sm:$0x1] %vm877, %v830
      %891 = vst.msk [vmem:[#allocation2 + $0x4f] sm:$0xfe] %vm873, %v832
      %892 = vst.msk [vmem:[#allocation2 + $0x57] sm:$0xff] %vm875, %v834
      %893 = vst.msk [vmem:[#allocation2 + $0x5f] sm:$0x1] %vm877, %v836
      %894 = vst.msk [vmem:[#allocation2 + $0x5f] sm:$0xfe] %vm873, %v838
      %895 = vst.msk [vmem:[#allocation2 + $0x67] sm:$0xff] %vm875, %v840
      %896 = vst.msk [vmem:[#allocation2 + $0x6f] sm:$0x1] %vm877, %v842
      %897 = vst.msk [vmem:[#allocation2 + $0x6f] sm:$0xfe] %vm873, %v844
      %898 = vst.msk [vmem:[#allocation2 + $0x77] sm:$0xff] %vm875, %v846
      %899 = vst.msk [vmem:[#allocation2 + $0x7f] sm:$0x1] %vm877, %v848
      %900 = vrot.lane.b32.xlu0 %v204, 32
      %v901 = vpop.permute.xlu0 %900
      %902 = vrot.lane.b32.xlu0 %v205, 32
      %v903 = vpop.permute.xlu0 %902
      %904 = vrot.lane.b32.xlu0 %v206, 32
      %v905 = vpop.permute.xlu0 %904
      %906 = vrot.lane.b32.xlu0 %v207, 32
      %v907 = vpop.permute.xlu0 %906
      %908 = vrot.lane.b32.xlu0 %v208, 32
      %v909 = vpop.permute.xlu0 %908
      %910 = vrot.lane.b32.xlu0 %v209, 32
      %v911 = vpop.permute.xlu0 %910
      %912 = vrot.lane.b32.xlu0 %v210, 32
      %v913 = vpop.permute.xlu0 %912
      %914 = vrot.lane.b32.xlu0 %v211, 32
      %v915 = vpop.permute.xlu0 %914
      %916 = vrot.lane.b32.xlu0 %v212, 32
      %v917 = vpop.permute.xlu0 %916
      %918 = vrot.lane.b32.xlu0 %v213, 32
      %v919 = vpop.permute.xlu0 %918
      %920 = vrot.lane.b32.xlu0 %v214, 32
      %v921 = vpop.permute.xlu0 %920
      %922 = vrot.lane.b32.xlu0 %v215, 32
      %v923 = vpop.permute.xlu0 %922
      %924 = vrot.lane.b32.xlu0 %v216, 32
      %v925 = vpop.permute.xlu0 %924
      %926 = vrot.lane.b32.xlu0 %v217, 32
      %v927 = vpop.permute.xlu0 %926
      %928 = vrot.lane.b32.xlu0 %v218, 32
      %v929 = vpop.permute.xlu0 %928
      %930 = vrot.lane.b32.xlu0 %v219, 32
      %v931 = vpop.permute.xlu0 %930
      %932 = vrot.lane.b32.xlu0 %v220, 32
      %v933 = vpop.permute.xlu0 %932
      %934 = vrot.lane.b32.xlu0 %v221, 32
      %v935 = vpop.permute.xlu0 %934
      %936 = vrot.lane.b32.xlu0 %v222, 32
      %v937 = vpop.permute.xlu0 %936
      %938 = vrot.lane.b32.xlu0 %v223, 32
      %v939 = vpop.permute.xlu0 %938
      %940 = vrot.lane.b32.xlu0 %v224, 32
      %v941 = vpop.permute.xlu0 %940
      %942 = vrot.lane.b32.xlu0 %v225, 32
      %v943 = vpop.permute.xlu0 %942
      %944 = vrot.lane.b32.xlu0 %v226, 32
      %v945 = vpop.permute.xlu0 %944
      %946 = vrot.lane.b32.xlu0 %v227, 32
      %v947 = vpop.permute.xlu0 %946
      %vm972 = vcmask 294146
      %973 = vst.msk [vmem:[#allocation2 - $0x2] sm:$0xfc] %vm972, %v901
      %vm974 = vcmask 294144
      %975 = vst.msk [vmem:[#allocation2 + $0x6] sm:$0xff] %vm974, %v903
      %vm976 = vcmask 288000
      %977 = vst.msk [vmem:[#allocation2 + $0xe] sm:$0x3] %vm976, %v905
      %978 = vst.msk [vmem:[#allocation2 + $0xe] sm:$0xfc] %vm972, %v907
      %979 = vst.msk [vmem:[#allocation2 + $0x16] sm:$0xff] %vm974, %v909
      %980 = vst.msk [vmem:[#allocation2 + $0x1e] sm:$0x3] %vm976, %v911
      %981 = vst.msk [vmem:[#allocation2 + $0x1e] sm:$0xfc] %vm972, %v913
      %982 = vst.msk [vmem:[#allocation2 + $0x26] sm:$0xff] %vm974, %v915
      %983 = vst.msk [vmem:[#allocation2 + $0x2e] sm:$0x3] %vm976, %v917
      %984 = vst.msk [vmem:[#allocation2 + $0x2e] sm:$0xfc] %vm972, %v919
      %985 = vst.msk [vmem:[#allocation2 + $0x36] sm:$0xff] %vm974, %v921
      %986 = vst.msk [vmem:[#allocation2 + $0x3e] sm:$0x3] %vm976, %v923
      %987 = vst.msk [vmem:[#allocation2 + $0x3e] sm:$0xfc] %vm972, %v925
      %988 = vst.msk [vmem:[#allocation2 + $0x46] sm:$0xff] %vm974, %v927
      %989 = vst.msk [vmem:[#allocation2 + $0x4e] sm:$0x3] %vm976, %v929
      %990 = vst.msk [vmem:[#allocation2 + $0x4e] sm:$0xfc] %vm972, %v931
      %991 = vst.msk [vmem:[#allocation2 + $0x56] sm:$0xff] %vm974, %v933
      %992 = vst.msk [vmem:[#allocation2 + $0x5e] sm:$0x3] %vm976, %v935
      %993 = vst.msk [vmem:[#allocation2 + $0x5e] sm:$0xfc] %vm972, %v937
      %994 = vst.msk [vmem:[#allocation2 + $0x66] sm:$0xff] %vm974, %v939
      %995 = vst.msk [vmem:[#allocation2 + $0x6e] sm:$0x3] %vm976, %v941
      %996 = vst.msk [vmem:[#allocation2 + $0x6e] sm:$0xfc] %vm972, %v943
      %997 = vst.msk [vmem:[#allocation2 + $0x76] sm:$0xff] %vm974, %v945
      %998 = vst.msk [vmem:[#allocation2 + $0x7e] sm:$0x3] %vm976, %v947
      %v999 = vld [vmem:[#allocation2] sm:$0xff]
      %v1000 = vld [vmem:[#allocation2 + $0x8] sm:$0xff]
      %v1001 = vld [vmem:[#allocation2 + $0x10] sm:$0xff]
      %v1002 = vld [vmem:[#allocation2 + $0x18] sm:$0xff]
      %v1003 = vld [vmem:[#allocation2 + $0x20] sm:$0xff]
      %v1004 = vld [vmem:[#allocation2 + $0x28] sm:$0xff]
      %v1005 = vld [vmem:[#allocation2 + $0x30] sm:$0xff]
      %v1006 = vld [vmem:[#allocation2 + $0x38] sm:$0xff]
      %v1007 = vld [vmem:[#allocation2 + $0x40] sm:$0xff]
      %v1008 = vld [vmem:[#allocation2 + $0x48] sm:$0xff]
      %v1009 = vld [vmem:[#allocation2 + $0x50] sm:$0xff]
      %v1010 = vld [vmem:[#allocation2 + $0x58] sm:$0xff]
      %v1011 = vld [vmem:[#allocation2 + $0x60] sm:$0xff]
      %v1012 = vld [vmem:[#allocation2 + $0x68] sm:$0xff]
      %v1013 = vld [vmem:[#allocation2 + $0x70] sm:$0xff]
      %v1014 = vld [vmem:[#allocation2 + $0x78] sm:$0xff]
      %v1015 = vld [vmem:[%s1] sm:$0xff]
      %v1016 = vld [vmem:[%s1 + $0x8] sm:$0xff]
      %v1017 = vld [vmem:[%s1 + $0x10] sm:$0xff]
      %v1018 = vld [vmem:[%s1 + $0x18] sm:$0xff]
      %v1019 = vld [vmem:[%s1 + $0x20] sm:$0xf]
      %vm1020 = vcmask 293888
      %v1022 = vsel %vm1020, %v999, 0
      %v1025 = vsel %vm1020, %v1000, 0
      %v1028 = vsel %vm1020, %v1001, 0
      %v1031 = vsel %vm1020, %v1002, 0
      %v1034 = vsel %vm1020, %v1003, 0
      %v1037 = vsel %vm1020, %v1004, 0
      %v1040 = vsel %vm1020, %v1005, 0
      %v1043 = vsel %vm1020, %v1006, 0
      %v1046 = vsel %vm1020, %v1007, 0
      %v1049 = vsel %vm1020, %v1008, 0
      %v1052 = vsel %vm1020, %v1009, 0
      %v1055 = vsel %vm1020, %v1010, 0
      %v1058 = vsel %vm1020, %v1011, 0
      %v1061 = vsel %vm1020, %v1012, 0
      %v1064 = vsel %vm1020, %v1013, 0
      %v1067 = vsel %vm1020, %v1014, 0
      %vm1069 = vcmask 1043456
      %v1071 = vsel %vm1069, %v1019, 0
      %1073 = vmatprep.subr.mxu0 0.0
      %1074 = vmatpush1.msra.mxu0 %v1015
      %1075 = vmatprep.subr.mxu0 0.0
      %1076 = vmatpush1.msra.mxu0 %v1016
      %1077 = vmatprep.subr.mxu0 0.0
      %1078 = vmatpush1.msra.mxu0 %v1017
      %1079 = vmatprep.subr.mxu0 0.0
      %1080 = vmatpush1.msra.mxu0 %v1018
      %1081 = vmatprep.subr.mxu0 0.0
      %1082 = vmatpush1.msra.mxu0 %v1071
      %1083 = vmatprep.subr.mxu0 0.0
      %1084 = vmatpush1.msra.mxu0 0.0
      %1085 = vmatprep.subr.mxu0 0.0
      %1086 = vmatpush1.msra.mxu0 0.0
      %1087 = vmatprep.subr.mxu0 0.0
      %1088 = vmatpush1.msra.mxu0 0.0
      %1089 = vmatprep.subr.mxu0 0.0
      %1090 = vmatpush1.msra.mxu0 0.0
      %1091 = vmatprep.subr.mxu0 0.0
      %1092 = vmatpush1.msra.mxu0 0.0
      %1093 = vmatprep.subr.mxu0 0.0
      %1094 = vmatpush1.msra.mxu0 0.0
      %1095 = vmatprep.subr.mxu0 0.0
      %1096 = vmatpush1.msra.mxu0 0.0
      %1097 = vmatprep.subr.mxu0 0.0
      %1098 = vmatpush1.msra.mxu0 0.0
      %1099 = vmatprep.subr.mxu0 0.0
      %1100 = vmatpush1.msra.mxu0 0.0
      %1101 = vmatprep.subr.mxu0 0.0
      %1102 = vmatpush1.msra.mxu0 0.0
      %1103 = vmatprep.subr.mxu0 0.0
      %1104 = vmatpush1.msra.mxu0 0.0
      %1105 = vmatprep.subr.mxu0 0.0
      %1106 = vmatpush1.msra.mxu0 0.0
      %1107 = vmatprep.subr.mxu0 0.0
      %1108 = vmatpush1.msra.mxu0 0.0
      %1109 = vmatprep.subr.mxu0 0.0
      %1110 = vmatpush1.msra.mxu0 0.0
      %1111 = vmatprep.subr.mxu0 0.0
      %1112 = vmatpush1.msra.mxu0 0.0
      %1113 = vmatprep.subr.mxu0 0.0
      %1114 = vmatpush1.msra.mxu0 0.0
      %1115 = vmatprep.subr.mxu0 0.0
      %1116 = vmatpush1.msra.mxu0 0.0
      %1117 = vmatprep.subr.mxu0 0.0
      %1118 = vmatpush1.msra.mxu0 0.0
      %1119 = vmatprep.subr.mxu0 0.0
      %1120 = vmatpush1.msra.mxu0 0.0
      %1121 = vmatprep.subr.mxu0 0.0
      %1122 = vmatpush1.msra.mxu0 0.0
      %1123 = vmatprep.subr.mxu0 0.0
      %1124 = vmatpush1.msra.mxu0 0.0
      %1125 = vmatprep.subr.mxu0 0.0
      %1126 = vmatpush1.msra.mxu0 0.0
      %1127 = vmatprep.subr.mxu0 0.0
      %1128 = vmatpush1.msra.mxu0 0.0
      %1129 = vmatprep.subr.mxu0 0.0
      %1130 = vmatpush1.msra.mxu0 0.0
      %1131 = vmatprep.subr.mxu0 0.0
      %1132 = vmatpush1.msra.mxu0 0.0
      %1133 = vmatprep.subr.mxu0 0.0
      %1134 = vmatpush1.msra.mxu0 0.0
      %1135 = vmatprep.subr.mxu0 0.0
      %1136 = vmatpush1.msra.mxu0 0.0
      %1137 = vmatprep.mubr.f32.mxu0 0.0
      %1138 = vmatmul.mubr.f32.gmra.mrb[0].mxu0 %v1022
      %v1139 = vpop.f32.mrb[0].mxu0
      %v1140 = vadd.f32 0.0, %v1139
      %v1141 = vpop.f32.mrb[0].mxu0
      %1142 = vmatprep.mubr.f32.mxu0 0.0
      %1143 = vmatmul.mubr.f32.gmra.mrb[0].mxu0 %v1025
      %v1144 = vpop.f32.mrb[0].mxu0
      %v1145 = vadd.f32 0.0, %v1144
      %v1146 = vpop.f32.mrb[0].mxu0
      %1147 = vmatprep.mubr.f32.mxu0 0.0
      %1148 = vmatmul.mubr.f32.gmra.mrb[0].mxu0 %v1028
      %v1149 = vpop.f32.mrb[0].mxu0
      %v1150 = vadd.f32 0.0, %v1149
      %v1151 = vpop.f32.mrb[0].mxu0
      %1152 = vmatprep.mubr.f32.mxu0 0.0
      %1153 = vmatmul.mubr.f32.gmra.mrb[0].mxu0 %v1031
      %v1154 = vpop.f32.mrb[0].mxu0
      %v1155 = vadd.f32 0.0, %v1154
      %v1156 = vpop.f32.mrb[0].mxu0
      %1157 = vmatprep.mubr.f32.mxu0 0.0
      %1158 = vmatmul.mubr.f32.gmra.mrb[0].mxu0 %v1034
      %v1159 = vpop.f32.mrb[0].mxu0
      %v1160 = vadd.f32 0.0, %v1159
      %v1161 = vpop.f32.mrb[0].mxu0
      %1162 = vmatprep.mubr.f32.mxu0 0.0
      %1163 = vmatmul.mubr.f32.gmra.mrb[0].mxu0 %v1037
      %v1164 = vpop.f32.mrb[0].mxu0
      %v1165 = vadd.f32 0.0, %v1164
      %v1166 = vpop.f32.mrb[0].mxu0
      %1167 = vmatprep.mubr.f32.mxu0 0.0
      %1168 = vmatmul.mubr.f32.gmra.mrb[0].mxu0 %v1040
      %v1169 = vpop.f32.mrb[0].mxu0
      %v1170 = vadd.f32 0.0, %v1169
      %v1171 = vpop.f32.mrb[0].mxu0
      %1172 = vmatprep.mubr.f32.mxu0 0.0
      %1173 = vmatmul.mubr.f32.gmra.mrb[0].mxu0 %v1043
      %v1174 = vpop.f32.mrb[0].mxu0
      %v1175 = vadd.f32 0.0, %v1174
      %v1176 = vpop.f32.mrb[0].mxu0
      %1177 = vmatprep.mubr.f32.mxu0 0.0
      %1178 = vmatmul.mubr.f32.gmra.mrb[0].mxu0 %v1046
      %v1179 = vpop.f32.mrb[0].mxu0
      %v1180 = vadd.f32 0.0, %v1179
      %v1181 = vpop.f32.mrb[0].mxu0
      %1182 = vmatprep.mubr.f32.mxu0 0.0
      %1183 = vmatmul.mubr.f32.gmra.mrb[0].mxu0 %v1049
      %v1184 = vpop.f32.mrb[0].mxu0
      %v1185 = vadd.f32 0.0, %v1184
      %v1186 = vpop.f32.mrb[0].mxu0
      %1187 = vmatprep.mubr.f32.mxu0 0.0
      %1188 = vmatmul.mubr.f32.gmra.mrb[0].mxu0 %v1052
      %v1189 = vpop.f32.mrb[0].mxu0
      %v1190 = vadd.f32 0.0, %v1189
      %v1191 = vpop.f32.mrb[0].mxu0
      %1192 = vmatprep.mubr.f32.mxu0 0.0
      %1193 = vmatmul.mubr.f32.gmra.mrb[0].mxu0 %v1055
      %v1194 = vpop.f32.mrb[0].mxu0
      %v1195 = vadd.f32 0.0, %v1194
      %v1196 = vpop.f32.mrb[0].mxu0
      %1197 = vmatprep.mubr.f32.mxu0 0.0
      %1198 = vmatmul.mubr.f32.gmra.mrb[0].mxu0 %v1058
      %v1199 = vpop.f32.mrb[0].mxu0
      %v1200 = vadd.f32 0.0, %v1199
      %v1201 = vpop.f32.mrb[0].mxu0
      %1202 = vmatprep.mubr.f32.mxu0 0.0
      %1203 = vmatmul.mubr.f32.gmra.mrb[0].mxu0 %v1061
      %v1204 = vpop.f32.mrb[0].mxu0
      %v1205 = vadd.f32 0.0, %v1204
      %v1206 = vpop.f32.mrb[0].mxu0
      %1207 = vmatprep.mubr.f32.mxu0 0.0
      %1208 = vmatmul.mubr.f32.gmra.mrb[0].mxu0 %v1064
      %v1209 = vpop.f32.mrb[0].mxu0
      %v1210 = vadd.f32 0.0, %v1209
      %v1211 = vpop.f32.mrb[0].mxu0
      %1212 = vmatprep.mubr.f32.mxu0 0.0
      %1213 = vmatmul.mubr.f32.gmra.mrb[0].mxu0 %v1067
      %v1214 = vpop.f32.mrb[0].mxu0
      %v1215 = vadd.f32 0.0, %v1214
      %v1216 = vpop.f32.mrb[0].mxu0
      %1217 = vdwg.mxu0
      %v1218 = vld [vmem:[%s2] sm:$0x1]
      %v1220 = vlaneseq
      %v1221 = vshrl.u32 %v1220, 7
      %v1222 = vsub.s32 0, %v1221
      %v1223 = vrot.slane %v1218, %v1222
      %v1225 = vmul.f32 %v1140, %v1223
      %v1226 = vmul.f32 %v1145, %v1223
      %v1227 = vmul.f32 %v1150, %v1223
      %v1228 = vmul.f32 %v1155, %v1223
      %v1229 = vmul.f32 %v1160, %v1223
      %v1230 = vmul.f32 %v1165, %v1223
      %v1231 = vmul.f32 %v1170, %v1223
      %v1232 = vmul.f32 %v1175, %v1223
      %v1233 = vmul.f32 %v1180, %v1223
      %v1234 = vmul.f32 %v1185, %v1223
      %v1235 = vmul.f32 %v1190, %v1223
      %v1236 = vmul.f32 %v1195, %v1223
      %v1237 = vmul.f32 %v1200, %v1223
      %v1238 = vmul.f32 %v1205, %v1223
      %v1239 = vmul.f32 %v1210, %v1223
      %v1240 = vmul.f32 %v1215, %v1223
      %v1241 = vld [vmem:[%s3] sm:$0x1]
      %v1243 = vlaneseq
      %v1244 = vshrl.u32 %v1243, 7
      %v1245 = vsub.s32 0, %v1244
      %v1246 = vrot.slane %v1241, %v1245
      %v1248 = vadd.f32 %v1225, %v1246
      %v1249 = vadd.f32 %v1226, %v1246
      %v1250 = vadd.f32 %v1227, %v1246
      %v1251 = vadd.f32 %v1228, %v1246
      %v1252 = vadd.f32 %v1229, %v1246
      %v1253 = vadd.f32 %v1230, %v1246
      %v1254 = vadd.f32 %v1231, %v1246
      %v1255 = vadd.f32 %v1232, %v1246
      %v1256 = vadd.f32 %v1233, %v1246
      %v1257 = vadd.f32 %v1234, %v1246
      %v1258 = vadd.f32 %v1235, %v1246
      %v1259 = vadd.f32 %v1236, %v1246
      %v1260 = vadd.f32 %v1237, %v1246
      %v1261 = vadd.f32 %v1238, %v1246
      %v1262 = vadd.f32 %v1239, %v1246
      %v1263 = vadd.f32 %v1240, %v1246
      %1264 = vst [vmem:[%s197] sm:$0xff] %v1248
      %1265 = vst [vmem:[%s197 + $0x8] sm:$0xff] %v1249
      %1266 = vst [vmem:[%s197 + $0x10] sm:$0xff] %v1250
      %1267 = vst [vmem:[%s197 + $0x18] sm:$0xff] %v1251
      %1268 = vst [vmem:[%s197 + $0x20] sm:$0xff] %v1252
      %1269 = vst [vmem:[%s197 + $0x28] sm:$0xff] %v1253
      %1270 = vst [vmem:[%s197 + $0x30] sm:$0xff] %v1254
      %1271 = vst [vmem:[%s197 + $0x38] sm:$0xff] %v1255
      %1272 = vst [vmem:[%s197 + $0x40] sm:$0xff] %v1256
      %1273 = vst [vmem:[%s197 + $0x48] sm:$0xff] %v1257
      %1274 = vst [vmem:[%s197 + $0x50] sm:$0xff] %v1258
      %1275 = vst [vmem:[%s197 + $0x58] sm:$0xff] %v1259
      %1276 = vst [vmem:[%s197 + $0x60] sm:$0xff] %v1260
      %1277 = vst [vmem:[%s197 + $0x68] sm:$0xff] %v1261
      %1278 = vst [vmem:[%s197 + $0x70] sm:$0xff] %v1262
      %1279 = vst [vmem:[%s197 + $0x78] sm:$0xff] %v1263
      %p1280 = scmp.lt.s32.totalorder %s15, 3
      %s1281 = scalar_select %p1280, %s15, 3
      %s1282 = smul.addr %s1281, 16
      %s1283 = smul.addr %s1282, 8
      %s1284 = scalar_lea.vmem %s4, %s1283
      // Predicated region
      $region37: #{basic_conv2d_bn.1} parent=35 // pred_check
        %p1285 = pneg %p122
      $region38: #{basic_conv2d_bn.1} parent=35 // pred_check_branch
        %1287 = sbr.rel (%p1285) target = $region40
      $region39: #{basic_conv2d_bn.1} parent=35 // pred_region
        _
      $region40: #{basic_conv2d_bn.1} parent=35 // pred_fallthru
        _
    $region36: #{basic_conv2d_bn.1} parent=5 // pred_fallthru
      _
    %p1288 = scmp.le.s32.totalorder 2, %s10
    // Predicated region
    $region41: #{basic_conv2d_bn.1} parent=5 // pred_check
      %p1289 = pneg %p1288
    $region42: #{basic_conv2d_bn.1} parent=5 // pred_check_branch
      %1291 = sbr.rel (%p1289) target = $region44
    $region43: #{basic_conv2d_bn.1} parent=5 // pred_region
      %s1292 = ssub.s32 %s10, 2
      // Predicated region
      $region45: #{basic_conv2d_bn.1} parent=43 // pred_check
        %p1293 = pneg %p128
      $region46: #{basic_conv2d_bn.1} parent=43 // pred_check_branch
        %1295 = sbr.rel (%p1293) target = $region48
      $region47: #{basic_conv2d_bn.1} parent=43 // pred_region
        %p1296 = scmp.lt.s32.totalorder %s16, 3
        %s1297 = scalar_select %p1296, %s16, 3
        %s1298 = smul.addr %s1297, 16
        %s1299 = smul.addr %s1298, 8
        %s1300 = scalar_lea.vmem %s4, %s1299
      $region48: #{basic_conv2d_bn.1} parent=43 // pred_fallthru
        _
    $region44: #{basic_conv2d_bn.1} parent=5 // pred_fallthru
      _
  $region6: #{basic_conv2d_bn.1} parent=0 // loop_footer
    %s14 = sadd.s32 1, %s10
  $region7: #{basic_conv2d_bn.1} parent=0 // loop_footer_branch
    %9 = sbr.rel target = $region3
  $region8: #{basic_conv2d_bn.1} parent=0 // loop_exit
    _

</llo_original>
